<compile_context>
chip_gen: v6e
topology: v6e:2x2x1
jax: 0.10.0
libtpu: 0.0.40
codegen_flags: <defaults>
</compile_context>

<pallas_src>
import jax
import jax.numpy as jnp
from jax import lax
from jax.experimental import pallas as pl
from jax.experimental.pallas import tpu as pltpu


def _free_embedding_kernel(user_aug_ref, prod_aug_ref, up_ref, w_ref, bias_ref,
                           user_out_ref, prod_out_ref):
    user_aug = user_aug_ref[...]      # (Nu, D+1)
    prod_aug = prod_aug_ref[...]      # (Np, D+1)
    up = up_ref[...]                  # (Nu, Np)
    w = w_ref[...]                    # (D, Do)
    d = w.shape[0]

    b_user = bias_ref[0:1, :]         # (1, D)
    b_prod = bias_ref[1:2, :]         # (1, D)

    # Averaging matmuls. The appended ones column makes the last output column
    # equal to the row/col click counts, so no separate reductions are needed.
    # dot_general contracts over up's axis 0 -> no materialized up.T.
    prod_sum_aug = jnp.dot(up, prod_aug,
                           preferred_element_type=jnp.float32)       # (Nu, D+1)
    user_sum_aug = lax.dot_general(
        up, user_aug,
        dimension_numbers=(((0,), (0,)), ((), ())),
        preferred_element_type=jnp.float32)                          # (Np, D+1)

    prod_sum = prod_sum_aug[:, :d]                    # (Nu, D)
    user_sum = user_sum_aug[:, :d]                    # (Np, D)
    n_product_clicked = prod_sum_aug[:, d:d + 1]      # (Nu, 1)
    n_user_click = user_sum_aug[:, d:d + 1]           # (Np, 1)

    # Zero-count guard (matches torch.where(count == 0, 1, count)).
    n_product_clicked = jnp.where(n_product_clicked == 0.0, 1.0,
                                  n_product_clicked)
    n_user_click = jnp.where(n_user_click == 0.0, 1.0, n_user_click)

    # EUP reciprocal + one Newton-Raphson step (restores ~f32 accuracy while
    # keeping the divide off the VPU critical path).
    inv_pc = pl.reciprocal(n_product_clicked, approx=True)
    inv_pc = inv_pc * (2.0 - n_product_clicked * inv_pc)
    inv_uc = pl.reciprocal(n_user_click, approx=True)
    inv_uc = inv_uc * (2.0 - n_user_click * inv_uc)

    user = user_aug[:, :d]                            # (Nu, D)
    product = prod_aug[:, :d]                         # (Np, D)

    # Projection matmuls, written straight into the two output refs.
    user_out_ref[...] = jnp.dot(user + prod_sum * inv_pc + b_user, w,
                                preferred_element_type=jnp.float32)
    prod_out_ref[...] = jnp.dot(product + user_sum * inv_uc + b_prod, w,
                                preferred_element_type=jnp.float32)


def free_embedding_layer(items, user_product, weight, bias):
    user, product = items[0], items[1]
    n_user, d = user.shape
    n_product, _ = product.shape
    d_out = weight.shape[1]
    f32 = jnp.float32

    # Wrapper-side layout plumbing: append a ones column so the in-kernel
    # averaging matmuls also produce the click counts (D=32 already pads to a
    # 128-lane vreg, so the extra column is free inside the kernel).
    user_aug = jnp.concatenate(
        [user.astype(f32), jnp.ones((n_user, 1), f32)], axis=1)
    prod_aug = jnp.concatenate(
        [product.astype(f32), jnp.ones((n_product, 1), f32)], axis=1)

    vmem = pl.BlockSpec(memory_space=pltpu.MemorySpace.VMEM)
    user_out, prod_out = pl.pallas_call(
        _free_embedding_kernel,
        out_shape=(jax.ShapeDtypeStruct((n_user, d_out), f32),
                   jax.ShapeDtypeStruct((n_product, d_out), f32)),
        in_specs=[vmem, vmem, vmem, vmem, vmem],
        out_specs=(vmem, vmem),
    )(user_aug, prod_aug, user_product.astype(f32), weight.astype(f32),
      bias.astype(f32))
    return user_out, prod_out


def _reference(items, user_product, weight, bias):
    user, product = items[0], items[1]
    n_product_clicked = jnp.sum(user_product, axis=1)[:, None]
    n_user_click = jnp.sum(user_product.T, axis=1)[:, None]
    n_product_clicked = jnp.where(n_product_clicked == 0,
                                  jnp.ones_like(n_product_clicked),
                                  n_product_clicked)
    n_user_click = jnp.where(n_user_click == 0,
                             jnp.ones_like(n_user_click), n_user_click)
    product_clicked_embedding = user_product @ product / n_product_clicked
    user_click_embedding = user_product.T @ user / n_user_click
    user_o = (user + product_clicked_embedding + bias[0]) @ weight
    product_o = (product + user_click_embedding + bias[1]) @ weight
    return user_o, product_o


if __name__ == "__main__":
    key = jax.random.PRNGKey(0)
    k_user, k_prod, k_up, k_w, k_b = jax.random.split(key, 5)

    N_USER, N_PRODUCT, D, D_OUT = 16, 8, 32, 32

    user = jax.random.normal(k_user, (N_USER, D), dtype=jnp.float32)
    product = jax.random.normal(k_prod, (N_PRODUCT, D), dtype=jnp.float32)
    # Sparse-ish click matrix; some all-zero rows/cols possible.
    user_product = (jax.random.uniform(k_up, (N_USER, N_PRODUCT)) > 0.7
                    ).astype(jnp.float32)
    weight = jax.random.normal(k_w, (D, D_OUT), dtype=jnp.float32) * 0.1
    bias = jax.random.normal(k_b, (2, D), dtype=jnp.float32) * 0.1

    items = (user, product)

    user_out, product_out = free_embedding_layer(items, user_product, weight,
                                                 bias)
    jax.block_until_ready((user_out, product_out))

    user_ref, product_ref = _reference(items, user_product, weight, bias)
    assert user_out.shape == (N_USER, D_OUT)
    assert product_out.shape == (N_PRODUCT, D_OUT)
    assert jnp.allclose(user_out, user_ref, atol=1e-4, rtol=1e-4)
    assert jnp.allclose(product_out, product_ref, atol=1e-4, rtol=1e-4)

    print("KERNEL_OK")
</pallas_src>

<mosaic_0001>
module attributes {stable_mosaic.version = 11 : i64} {
  func.func @_free_embedding_kernel(%arg0: memref<16x33xf32, #tpu.memory_space<vmem>>, %arg1: memref<8x33xf32, #tpu.memory_space<vmem>>, %arg2: memref<16x8xf32, #tpu.memory_space<vmem>>, %arg3: memref<32x32xf32, #tpu.memory_space<vmem>>, %arg4: memref<2x32xf32, #tpu.memory_space<vmem>>, %arg5: memref<16x32xf32, #tpu.memory_space<vmem>>, %arg6: memref<8x32xf32, #tpu.memory_space<vmem>>) attributes {dimension_semantics = [], scalar_prefetch = 0 : i64, scratch_operands = 0 : i64, tpu.core_type = #tpu.core_type<tc>} {
    %c0 = arith.constant 0 : index
    %c0_0 = arith.constant 0 : index
    %0 = vector.load %arg0[%c0, %c0_0] : memref<16x33xf32, #tpu.memory_space<vmem>>, vector<16x33xf32>
    %c0_1 = arith.constant 0 : index
    %c0_2 = arith.constant 0 : index
    %1 = vector.load %arg1[%c0_1, %c0_2] : memref<8x33xf32, #tpu.memory_space<vmem>>, vector<8x33xf32>
    %c0_3 = arith.constant 0 : index
    %c0_4 = arith.constant 0 : index
    %2 = vector.load %arg2[%c0_3, %c0_4] : memref<16x8xf32, #tpu.memory_space<vmem>>, vector<16x8xf32>
    %c0_5 = arith.constant 0 : index
    %c0_6 = arith.constant 0 : index
    %3 = vector.load %arg3[%c0_5, %c0_6] : memref<32x32xf32, #tpu.memory_space<vmem>>, vector<32x32xf32>
    %c0_7 = arith.constant 0 : index
    %c0_8 = arith.constant 0 : index
    %4 = vector.load %arg4[%c0_7, %c0_8] : memref<2x32xf32, #tpu.memory_space<vmem>>, vector<1x32xf32>
    %c1 = arith.constant 1 : index
    %c0_9 = arith.constant 0 : index
    %5 = vector.load %arg4[%c1, %c0_9] : memref<2x32xf32, #tpu.memory_space<vmem>>, vector<1x32xf32>
    %cst = arith.constant dense<0.000000e+00> : vector<16x33xf32>
    %6 = tpu.matmul %2, %1, %cst {dimension_numbers = #tpu.dot_dimension_numbers<[1], [0], [0], [1], [0, 0, 1, 1], [], []>} : vector<16x8xf32>, vector<8x33xf32>, vector<16x33xf32> -> vector<16x33xf32>
    %cst_10 = arith.constant dense<0.000000e+00> : vector<8x33xf32>
    %7 = tpu.matmul %2, %0, %cst_10 {dimension_numbers = #tpu.dot_dimension_numbers<[0], [0], [1], [1], [0, 1, 1, 1], [], []>} : vector<16x8xf32>, vector<16x33xf32>, vector<8x33xf32> -> vector<8x33xf32>
    %8 = vector.extract_strided_slice %6 {offsets = [0, 0], sizes = [16, 32], strides = [1, 1]} : vector<16x33xf32> to vector<16x32xf32>
    %9 = vector.extract_strided_slice %7 {offsets = [0, 0], sizes = [8, 32], strides = [1, 1]} : vector<8x33xf32> to vector<8x32xf32>
    %10 = vector.extract_strided_slice %6 {offsets = [0, 32], sizes = [16, 1], strides = [1, 1]} : vector<16x33xf32> to vector<16x1xf32>
    %11 = vector.extract_strided_slice %7 {offsets = [0, 32], sizes = [8, 1], strides = [1, 1]} : vector<8x33xf32> to vector<8x1xf32>
    %cst_11 = arith.constant 0.000000e+00 : f32
    %12 = vector.broadcast %cst_11 : f32 to vector<16x1xf32>
    %13 = arith.cmpf oeq, %10, %12 : vector<16x1xf32>
    %cst_12 = arith.constant 1.000000e+00 : f32
    %14 = vector.broadcast %cst_12 : f32 to vector<16x1xf32>
    %15 = arith.select %13, %14, %10 : vector<16x1xi1>, vector<16x1xf32>
    %cst_13 = arith.constant 0.000000e+00 : f32
    %16 = vector.broadcast %cst_13 : f32 to vector<8x1xf32>
    %17 = arith.cmpf oeq, %11, %16 : vector<8x1xf32>
    %cst_14 = arith.constant 1.000000e+00 : f32
    %18 = vector.broadcast %cst_14 : f32 to vector<8x1xf32>
    %19 = arith.select %17, %18, %11 : vector<8x1xi1>, vector<8x1xf32>
    %20 = tpu.reciprocal %15 {approx = true} : vector<16x1xf32> -> vector<16x1xf32>
    %21 = arith.mulf %15, %20 : vector<16x1xf32>
    %cst_15 = arith.constant 2.000000e+00 : f32
    %22 = vector.broadcast %cst_15 : f32 to vector<16x1xf32>
    %23 = arith.subf %22, %21 : vector<16x1xf32>
    %24 = arith.mulf %20, %23 : vector<16x1xf32>
    %25 = tpu.reciprocal %19 {approx = true} : vector<8x1xf32> -> vector<8x1xf32>
    %26 = arith.mulf %19, %25 : vector<8x1xf32>
    %cst_16 = arith.constant 2.000000e+00 : f32
    %27 = vector.broadcast %cst_16 : f32 to vector<8x1xf32>
    %28 = arith.subf %27, %26 : vector<8x1xf32>
    %29 = arith.mulf %25, %28 : vector<8x1xf32>
    %30 = vector.extract_strided_slice %0 {offsets = [0, 0], sizes = [16, 32], strides = [1, 1]} : vector<16x33xf32> to vector<16x32xf32>
    %31 = vector.extract_strided_slice %1 {offsets = [0, 0], sizes = [8, 32], strides = [1, 1]} : vector<8x33xf32> to vector<8x32xf32>
    %32 = vector.broadcast %24 : vector<16x1xf32> to vector<16x32xf32>
    %33 = arith.mulf %8, %32 : vector<16x32xf32>
    %34 = arith.addf %30, %33 : vector<16x32xf32>
    %35 = vector.broadcast %4 : vector<1x32xf32> to vector<16x32xf32>
    %36 = arith.addf %34, %35 : vector<16x32xf32>
    %cst_17 = arith.constant dense<0.000000e+00> : vector<16x32xf32>
    %37 = tpu.matmul %36, %3, %cst_17 {dimension_numbers = #tpu.dot_dimension_numbers<[1], [0], [0], [1], [0, 0, 1, 1], [], []>} : vector<16x32xf32>, vector<32x32xf32>, vector<16x32xf32> -> vector<16x32xf32>
    %c0_18 = arith.constant 0 : index
    %c0_19 = arith.constant 0 : index
    %38 = vector.load %arg5[%c0_18, %c0_19] : memref<16x32xf32, #tpu.memory_space<vmem>>, vector<16x32xf32>
    tpu.vector_store %arg5[%c0_18, %c0_19], %37 {strides = array<i32>} : memref<16x32xf32, #tpu.memory_space<vmem>>, vector<16x32xf32>,
    %39 = vector.broadcast %29 : vector<8x1xf32> to vector<8x32xf32>
    %40 = arith.mulf %9, %39 : vector<8x32xf32>
    %41 = arith.addf %31, %40 : vector<8x32xf32>
    %42 = vector.broadcast %5 : vector<1x32xf32> to vector<8x32xf32>
    %43 = arith.addf %41, %42 : vector<8x32xf32>
    %cst_20 = arith.constant dense<0.000000e+00> : vector<8x32xf32>
    %44 = tpu.matmul %43, %3, %cst_20 {dimension_numbers = #tpu.dot_dimension_numbers<[1], [0], [0], [1], [0, 0, 1, 1], [], []>} : vector<8x32xf32>, vector<32x32xf32>, vector<8x32xf32> -> vector<8x32xf32>
    %c0_21 = arith.constant 0 : index
    %c0_22 = arith.constant 0 : index
    %45 = vector.load %arg6[%c0_21, %c0_22] : memref<8x32xf32, #tpu.memory_space<vmem>>, vector<8x32xf32>
    tpu.vector_store %arg6[%c0_21, %c0_22], %44 {strides = array<i32>} : memref<8x32xf32, #tpu.memory_space<vmem>>, vector<8x32xf32>,
    return
  }
}

</mosaic_0001>

<llo_original>
// kernel: tpu_custom_call.1
$region0: #{tpu_custom_call.1}
  #allocation0 [shape = 'u32[]', space=smem, size = 0x4, offset = 0x4, fixed_abs, tag = 'smem constant byte address 0x4 - core index']
  #allocation1 [shape = 'u32[144,128]{1,0:T(1,128)}', space=vmem, size = 0x12000, scoped, tag = 'internal scratch']
  %s0 = inlined_call_operand.vmem [shape: f32[16,33], index: 0, kind: input, shape index: {}]
  %s1 = inlined_call_operand.vmem [shape: f32[8,33], index: 1, kind: input, shape index: {}]
  %s2 = inlined_call_operand.vmem [shape: f32[16,8], index: 2, kind: input, shape index: {}]
  %s3 = inlined_call_operand.hbm [shape: f32[32,32], index: 3, kind: input, shape index: {}]
  %s4 = inlined_call_operand.vmem [shape: f32[2,32], index: 4, kind: input, shape index: {}]
  %s5 = inlined_call_operand.hbm [shape: f32[16,32], index: 5, kind: output, shape index: {0}]
  %s6 = inlined_call_operand.hbm [shape: f32[8,32], index: 6, kind: output, shape index: {1}]
  %7 = xla_tuple %s5, %s6
  %s8 = sld [smem:[#allocation0]]
  $region42: #{tpu_custom_call.1} parent=0
    _
  %s10 = ssub.s32 1, %s8
  %s11 = scalar_select 0, %s10, %s8
  $region1: #{tpu_custom_call.1} parent=0
    #allocation2 [shape = 'u8[16384]{0}', space=vmem, size = 0x4000, scoped, tag = 'input window, operand 3, single buffered']
    #allocation3 [shape = 's32[1]{0}', space=sflag, size = 0x4, scoped, tag = 'scoped memory for tpu_custom_call.1']
    #allocation4 [shape = 's32[1]{0}', space=sflag, size = 0x4, scoped, tag = 'scoped memory for tpu_custom_call.1']
    #allocation5 [shape = 'u8[8192]{0}', space=vmem, size = 0x2000, scoped, tag = 'output window, operand 0, single buffered']
    #allocation6 [shape = 'u8[4096]{0}', space=vmem, size = 0x1000, scoped, tag = 'output window, operand 1, single buffered']
    #allocation7 [shape = 's32[1]{0}', space=sflag, size = 0x4, scoped, tag = 'scoped memory for tpu_custom_call.1']
    %12 = vsyncpa [#allocation3], 0
    %13 = vsyncpa [#allocation4], 0
    %14 = vsyncpa [#allocation7], 0
    // Predicated region
    $region2: #{tpu_custom_call.1} parent=1 // pred_check
      _
    $region3: #{tpu_custom_call.1} parent=1 // pred_check_branch
      %16 = sbr.rel (0) target = $region5
    $region4: #{tpu_custom_call.1} parent=1 // pred_region
      _
    $region5: #{tpu_custom_call.1} parent=1 // pred_fallthru
      _
    // Predicated region
    $region6: #{tpu_custom_call.1} parent=1 // pred_check
      _
    $region7: #{tpu_custom_call.1} parent=1 // pred_check_branch
      %18 = sbr.rel (0) target = $region9
    $region8: #{tpu_custom_call.1} parent=1 // pred_region
      _
    $region9: #{tpu_custom_call.1} parent=1 // pred_fallthru
      _
    // Predicated region
    $region10: #{tpu_custom_call.1} parent=1 // pred_check
      _
    $region11: #{tpu_custom_call.1} parent=1 // pred_check_branch
      %20 = sbr.rel (0) target = $region13
    $region12: #{tpu_custom_call.1} parent=1 // pred_region
      _
    $region13: #{tpu_custom_call.1} parent=1 // pred_fallthru
      _
    // Predicated region
    $region14: #{tpu_custom_call.1} parent=1 // pred_check
      _
    $region15: #{tpu_custom_call.1} parent=1 // pred_check_branch
      %22 = sbr.rel (0) target = $region17
    $region16: #{tpu_custom_call.1} parent=1 // pred_region
      %s24 = ssub.s32 512, 512
      %25 = vsyncadd [#allocation3], %s24
      %s26 = sshll.u32 [#allocation2], 4
      %s27 = int_to_ptr.vmem [resolvable:$true] %s26
      %32 = dma.hbm_to_vmem [thread:$0]  %s3, 512, %s27, [#allocation3], 128, 128, 8
    $region17: #{tpu_custom_call.1} parent=1 // pred_fallthru
      _
    // Predicated region
    $region18: #{tpu_custom_call.1} parent=1 // pred_check
      _
    $region19: #{tpu_custom_call.1} parent=1 // pred_check_branch
      %34 = sbr.rel (0) target = $region21
    $region20: #{tpu_custom_call.1} parent=1 // pred_region
      _
    $region21: #{tpu_custom_call.1} parent=1 // pred_fallthru
      _
    // Predicated region
    $region22: #{tpu_custom_call.1} parent=1 // pred_check
      _
    $region23: #{tpu_custom_call.1} parent=1 // pred_check_branch
      %36 = sbr.rel (0) target = $region25
    $region24: #{tpu_custom_call.1} parent=1 // pred_region
      %37 = dma.done [#allocation3], 512
    $region25: #{tpu_custom_call.1} parent=1 // pred_fallthru
      _
    %v38 = vld [vmem:[%s0] sm:$0xff]
    %v39 = vld [vmem:[%s0 + $0x8] sm:$0xff]
    %v40 = vld [vmem:[%s1] sm:$0xff]
    %v41 = vld [vmem:[%s2] sm:$0xff]
    %v42 = vld [vmem:[%s2 + $0x8] sm:$0xff]
    %v43 = vld [vmem:[#allocation2] sm:$0xff]
    %v44 = vld [vmem:[#allocation2 + $0x8] sm:$0xff]
    %v45 = vld [vmem:[#allocation2 + $0x10] sm:$0xff]
    %v46 = vld [vmem:[#allocation2 + $0x18] sm:$0xff]
    %v47 = vld [vmem:[%s4] sm:$0x1]
    %v48 = vld [vmem:[%s4 + $0x1] sm:$0x1]
    %vm49 = vcmask 64512
    %v51 = vsel %vm49, %v41, 0
    %v54 = vsel %vm49, %v42, 0
    %56 = vmatprep.subr.mxu0 0.0
    %57 = vmatpush1.msra.mxu0 0.0
    %58 = vmatprep.subr.mxu0 0.0
    %59 = vmatpush1.msra.mxu0 0.0
    %60 = vmatprep.subr.mxu0 0.0
    %61 = vmatpush1.msra.mxu0 0.0
    %62 = vmatprep.subr.mxu0 0.0
    %63 = vmatpush1.msra.mxu0 0.0
    %64 = vmatprep.subr.mxu0 0.0
    %65 = vmatpush1.msra.mxu0 0.0
    %66 = vmatprep.subr.mxu0 0.0
    %67 = vmatpush1.msra.mxu0 0.0
    %68 = vmatprep.subr.mxu0 0.0
    %69 = vmatpush1.msra.mxu0 0.0
    %70 = vmatprep.subr.mxu0 0.0
    %71 = vmatpush1.msra.mxu0 0.0
    %72 = vmatprep.subr.mxu0 0.0
    %73 = vmatpush1.msra.mxu0 0.0
    %74 = vmatprep.subr.mxu0 0.0
    %75 = vmatpush1.msra.mxu0 0.0
    %76 = vmatprep.subr.mxu0 0.0
    %77 = vmatpush1.msra.mxu0 0.0
    %78 = vmatprep.subr.mxu0 0.0
    %79 = vmatpush1.msra.mxu0 0.0
    %80 = vmatprep.subr.mxu0 0.0
    %81 = vmatpush1.msra.mxu0 0.0
    %82 = vmatprep.subr.mxu0 0.0
    %83 = vmatpush1.msra.mxu0 0.0
    %84 = vmatprep.subr.mxu0 0.0
    %85 = vmatpush1.msra.mxu0 0.0
    %86 = vmatprep.subr.mxu0 0.0
    %87 = vmatpush1.msra.mxu0 %v40
    %88 = vmatprep.subr.mxu0 0.0
    %89 = vmatpush2.msra.mxu0 0.0
    %90 = vmatprep.subr.mxu0 0.0
    %91 = vmatpush2.msra.mxu0 0.0
    %92 = vmatprep.subr.mxu0 0.0
    %93 = vmatpush2.msra.mxu0 0.0
    %94 = vmatprep.subr.mxu0 0.0
    %95 = vmatpush2.msra.mxu0 0.0
    %96 = vmatprep.subr.mxu0 0.0
    %97 = vmatpush2.msra.mxu0 0.0
    %98 = vmatprep.subr.mxu0 0.0
    %99 = vmatpush2.msra.mxu0 0.0
    %100 = vmatprep.subr.mxu0 0.0
    %101 = vmatpush2.msra.mxu0 0.0
    %102 = vmatprep.subr.mxu0 0.0
    %103 = vmatpush2.msra.mxu0 0.0
    %104 = vmatprep.subr.mxu0 0.0
    %105 = vmatpush2.msra.mxu0 0.0
    %106 = vmatprep.subr.mxu0 0.0
    %107 = vmatpush2.msra.mxu0 0.0
    %108 = vmatprep.subr.mxu0 0.0
    %109 = vmatpush2.msra.mxu0 0.0
    %110 = vmatprep.subr.mxu0 0.0
    %111 = vmatpush2.msra.mxu0 0.0
    %112 = vmatprep.subr.mxu0 0.0
    %113 = vmatpush2.msra.mxu0 0.0
    %114 = vmatprep.subr.mxu0 0.0
    %115 = vmatpush2.msra.mxu0 0.0
    %116 = vmatprep.subr.mxu0 0.0
    %117 = vmatpush2.msra.mxu0 0.0
    %118 = vmatprep.subr.mxu0 0.0
    %119 = vmatpush2.msra.mxu0 0.0
    %120 = vmatprep.mubr.f32.mxu0 0.0
    %121 = vmatmul.mubr.f32.gmra.mxu0 %v51
    %v122 = vpop.f32.mrf.mxu0
    %v123 = vadd.f32 0.0, %v122
    %v124 = vpop.f32.mrf.mxu0
    %125 = vmatprep.mubr.f32.mxu0 0.0
    %126 = vmatmul.mubr.f32.gmra.mxu0 %v54
    %v127 = vpop.f32.mrf.mxu0
    %v128 = vadd.f32 0.0, %v127
    %v129 = vpop.f32.mrf.mxu0
    %130 = vdwg.mxu0
    %131 = vxpose.xlu0.b32.start [1/16] %v41, 128
    %132 = vxpose.xlu0.b32.cont [2/16] %v42, 128
    %133 = vxpose.xlu0.b32.cont [3/16] 0.0, 128
    %134 = vxpose.xlu0.b32.cont [4/16] 0.0, 128
    %135 = vxpose.xlu0.b32.cont [5/16] 0.0, 128
    %136 = vxpose.xlu0.b32.cont [6/16] 0.0, 128
    %137 = vxpose.xlu0.b32.cont [7/16] 0.0, 128
    %138 = vxpose.xlu0.b32.cont [8/16] 0.0, 128
    %139 = vxpose.xlu0.b32.cont [9/16] 0.0, 128
    %140 = vxpose.xlu0.b32.cont [10/16] 0.0, 128
    %141 = vxpose.xlu0.b32.cont [11/16] 0.0, 128
    %142 = vxpose.xlu0.b32.cont [12/16] 0.0, 128
    %143 = vxpose.xlu0.b32.cont [13/16] 0.0, 128
    %144 = vxpose.xlu0.b32.cont [14/16] 0.0, 128
    %145 = vxpose.xlu0.b32.cont [15/16] 0.0, 128
    %146 = vxpose.xlu0.b32.end [16/16] 0.0, 128
    %v147 = vpop.trf.xlu0
    %v148 = vpop.trf.xlu0
    %v149 = vpop.trf.xlu0
    %v150 = vpop.trf.xlu0
    %v151 = vpop.trf.xlu0
    %v152 = vpop.trf.xlu0
    %v153 = vpop.trf.xlu0
    %v154 = vpop.trf.xlu0
    %v155 = vpop.trf.xlu0
    %v156 = vpop.trf.xlu0
    %v157 = vpop.trf.xlu0
    %v158 = vpop.trf.xlu0
    %v159 = vpop.trf.xlu0
    %v160 = vpop.trf.xlu0
    %v161 = vpop.trf.xlu0
    %v162 = vpop.trf.xlu0
    %vm163 = vcmask 130048
    %v165 = vsel %vm163, %v147, 0
    %167 = vmatprep.subr.mxu0 0.0
    %168 = vmatpush1.msra.mxu0 0.0
    %169 = vmatprep.subr.mxu0 0.0
    %170 = vmatpush1.msra.mxu0 0.0
    %171 = vmatprep.subr.mxu0 0.0
    %172 = vmatpush1.msra.mxu0 0.0
    %173 = vmatprep.subr.mxu0 0.0
    %174 = vmatpush1.msra.mxu0 0.0
    %175 = vmatprep.subr.mxu0 0.0
    %176 = vmatpush1.msra.mxu0 0.0
    %177 = vmatprep.subr.mxu0 0.0
    %178 = vmatpush1.msra.mxu0 0.0
    %179 = vmatprep.subr.mxu0 0.0
    %180 = vmatpush1.msra.mxu0 0.0
    %181 = vmatprep.subr.mxu0 0.0
    %182 = vmatpush1.msra.mxu0 0.0
    %183 = vmatprep.subr.mxu0 0.0
    %184 = vmatpush1.msra.mxu0 0.0
    %185 = vmatprep.subr.mxu0 0.0
    %186 = vmatpush1.msra.mxu0 0.0
    %187 = vmatprep.subr.mxu0 0.0
    %188 = vmatpush1.msra.mxu0 0.0
    %189 = vmatprep.subr.mxu0 0.0
    %190 = vmatpush1.msra.mxu0 0.0
    %191 = vmatprep.subr.mxu0 0.0
    %192 = vmatpush1.msra.mxu0 0.0
    %193 = vmatprep.subr.mxu0 0.0
    %194 = vmatpush1.msra.mxu0 0.0
    %195 = vmatprep.subr.mxu0 0.0
    %196 = vmatpush1.msra.mxu0 %v39
    %197 = vmatprep.subr.mxu0 0.0
    %198 = vmatpush1.msra.mxu0 %v38
    %199 = vmatprep.subr.mxu0 0.0
    %200 = vmatpush2.msra.mxu0 0.0
    %201 = vmatprep.subr.mxu0 0.0
    %202 = vmatpush2.msra.mxu0 0.0
    %203 = vmatprep.subr.mxu0 0.0
    %204 = vmatpush2.msra.mxu0 0.0
    %205 = vmatprep.subr.mxu0 0.0
    %206 = vmatpush2.msra.mxu0 0.0
    %207 = vmatprep.subr.mxu0 0.0
    %208 = vmatpush2.msra.mxu0 0.0
    %209 = vmatprep.subr.mxu0 0.0
    %210 = vmatpush2.msra.mxu0 0.0
    %211 = vmatprep.subr.mxu0 0.0
    %212 = vmatpush2.msra.mxu0 0.0
    %213 = vmatprep.subr.mxu0 0.0
    %214 = vmatpush2.msra.mxu0 0.0
    %215 = vmatprep.subr.mxu0 0.0
    %216 = vmatpush2.msra.mxu0 0.0
    %217 = vmatprep.subr.mxu0 0.0
    %218 = vmatpush2.msra.mxu0 0.0
    %219 = vmatprep.subr.mxu0 0.0
    %220 = vmatpush2.msra.mxu0 0.0
    %221 = vmatprep.subr.mxu0 0.0
    %222 = vmatpush2.msra.mxu0 0.0
    %223 = vmatprep.subr.mxu0 0.0
    %224 = vmatpush2.msra.mxu0 0.0
    %225 = vmatprep.subr.mxu0 0.0
    %226 = vmatpush2.msra.mxu0 0.0
    %227 = vmatprep.subr.mxu0 0.0
    %228 = vmatpush2.msra.mxu0 0.0
    %229 = vmatprep.subr.mxu0 0.0
    %230 = vmatpush2.msra.mxu0 0.0
    %231 = vmatprep.mubr.f32.mxu0 0.0
    %232 = vmatmul.mubr.f32.gmra.mxu0 %v165
    %v233 = vpop.f32.mrf.mxu0
    %v234 = vadd.f32 0.0, %v233
    %v235 = vpop.f32.mrf.mxu0
    %236 = vdwg.mxu0
    %vm237 = vcmp.eq.f32.partialorder %v123, 0.0
    %vm238 = vcmp.eq.f32.partialorder %v128, 0.0
    %v239 = vsel %vm237, 1.0, %v123
    %v240 = vsel %vm238, 1.0, %v128
    %vm241 = vcmp.eq.f32.partialorder %v234, 0.0
    %v242 = vsel %vm241, 1.0, %v234
    %v243 = vrcp.pop %v239
    %v244 = vrcp.pop %v240
    %v245 = vmul.f32 %v239, %v243
    %v246 = vmul.f32 %v240, %v244
    %v247 = vsub.f32 2.0, %v245
    %v248 = vsub.f32 2.0, %v246
    %v249 = vmul.f32 %v243, %v247
    %v250 = vmul.f32 %v244, %v248
    %v251 = vrcp.pop %v242
    %v252 = vmul.f32 %v242, %v251
    %v253 = vsub.f32 2.0, %v252
    %v254 = vmul.f32 %v251, %v253
    %256 = vset.pattern.permute.xlu0 32
    %257 = vperm.xlu0 %256, %v249
    %v258 = vpop.permute.xlu0 %257
    %261 = vset.pattern.permute.xlu0 32
    %262 = vperm.xlu0 %261, %v250
    %v263 = vpop.permute.xlu0 %262
    %v265 = vmul.f32 %v123, %v258
    %v266 = vmul.f32 %v128, %v263
    %v267 = vadd.f32 %v38, %v265
    %v268 = vadd.f32 %v39, %v266
    %v269 = vlaneseq
    %v270 = vshrl.u32 %v269, 7
    %v271 = vsub.s32 0, %v270
    %v272 = vrot.slane %v47, %v271
    %v273 = vadd.f32 %v267, %v272
    %v274 = vadd.f32 %v268, %v272
    %vm275 = vcmask 261120
    %v277 = vsel %vm275, %v273, 0
    %v280 = vsel %vm275, %v274, 0
    %282 = vmatprep.subr.mxu0 0.0
    %283 = vmatpush1.msra.mxu0 0.0
    %284 = vmatprep.subr.mxu0 0.0
    %285 = vmatpush1.msra.mxu0 0.0
    %286 = vmatprep.subr.mxu0 0.0
    %287 = vmatpush1.msra.mxu0 0.0
    %288 = vmatprep.subr.mxu0 0.0
    %289 = vmatpush1.msra.mxu0 0.0
    %290 = vmatprep.subr.mxu0 0.0
    %291 = vmatpush1.msra.mxu0 0.0
    %292 = vmatprep.subr.mxu0 0.0
    %293 = vmatpush1.msra.mxu0 0.0
    %294 = vmatprep.subr.mxu0 0.0
    %295 = vmatpush1.msra.mxu0 0.0
    %296 = vmatprep.subr.mxu0 0.0
    %297 = vmatpush1.msra.mxu0 0.0
    %298 = vmatprep.subr.mxu0 0.0
    %299 = vmatpush1.msra.mxu0 0.0
    %300 = vmatprep.subr.mxu0 0.0
    %301 = vmatpush1.msra.mxu0 0.0
    %302 = vmatprep.subr.mxu0 0.0
    %303 = vmatpush1.msra.mxu0 0.0
    %304 = vmatprep.subr.mxu0 0.0
    %305 = vmatpush1.msra.mxu0 0.0
    %306 = vmatprep.subr.mxu0 0.0
    %307 = vmatpush1.msra.mxu0 %v46
    %308 = vmatprep.subr.mxu0 0.0
    %309 = vmatpush1.msra.mxu0 %v45
    %310 = vmatprep.subr.mxu0 0.0
    %311 = vmatpush1.msra.mxu0 %v44
    %312 = vmatprep.subr.mxu0 0.0
    %313 = vmatpush1.msra.mxu0 %v43
    %314 = vmatprep.subr.mxu0 0.0
    %315 = vmatpush2.msra.mxu0 0.0
    %316 = vmatprep.subr.mxu0 0.0
    %317 = vmatpush2.msra.mxu0 0.0
    %318 = vmatprep.subr.mxu0 0.0
    %319 = vmatpush2.msra.mxu0 0.0
    %320 = vmatprep.subr.mxu0 0.0
    %321 = vmatpush2.msra.mxu0 0.0
    %322 = vmatprep.subr.mxu0 0.0
    %323 = vmatpush2.msra.mxu0 0.0
    %324 = vmatprep.subr.mxu0 0.0
    %325 = vmatpush2.msra.mxu0 0.0
    %326 = vmatprep.subr.mxu0 0.0
    %327 = vmatpush2.msra.mxu0 0.0
    %328 = vmatprep.subr.mxu0 0.0
    %329 = vmatpush2.msra.mxu0 0.0
    %330 = vmatprep.subr.mxu0 0.0
    %331 = vmatpush2.msra.mxu0 0.0
    %332 = vmatprep.subr.mxu0 0.0
    %333 = vmatpush2.msra.mxu0 0.0
    %334 = vmatprep.subr.mxu0 0.0
    %335 = vmatpush2.msra.mxu0 0.0
    %336 = vmatprep.subr.mxu0 0.0
    %337 = vmatpush2.msra.mxu0 0.0
    %338 = vmatprep.subr.mxu0 0.0
    %339 = vmatpush2.msra.mxu0 0.0
    %340 = vmatprep.subr.mxu0 0.0
    %341 = vmatpush2.msra.mxu0 0.0
    %342 = vmatprep.subr.mxu0 0.0
    %343 = vmatpush2.msra.mxu0 0.0
    %344 = vmatprep.subr.mxu0 0.0
    %345 = vmatpush2.msra.mxu0 0.0
    %346 = vmatprep.mubr.f32.mxu0 0.0
    %347 = vmatmul.mubr.f32.gmra.mxu0 %v277
    %v348 = vpop.f32.mrf.mxu0
    %v349 = vadd.f32 0.0, %v348
    %v350 = vpop.f32.mrf.mxu0
    %351 = vmatprep.mubr.f32.mxu0 0.0
    %352 = vmatmul.mubr.f32.gmra.mxu0 %v280
    %v353 = vpop.f32.mrf.mxu0
    %v354 = vadd.f32 0.0, %v353
    %v355 = vpop.f32.mrf.mxu0
    %356 = vdwg.mxu0
    %357 = vst.msk [vmem:[#allocation5] sm:$0xff] %vm275, %v349
    %358 = vst.msk [vmem:[#allocation5 + $0x8] sm:$0xff] %vm275, %v354
    %360 = vset.pattern.permute.xlu0 32
    %361 = vperm.xlu0 %360, %v254
    %v362 = vpop.permute.xlu0 %361
    %v364 = vmul.f32 %v234, %v362
    %v365 = vadd.f32 %v40, %v364
    %v366 = vlaneseq
    %v367 = vshrl.u32 %v366, 7
    %v368 = vsub.s32 0, %v367
    %v369 = vrot.slane %v48, %v368
    %v370 = vadd.f32 %v365, %v369
    %v372 = vsel %vm275, %v370, 0
    %374 = vmatprep.subr.mxu0 0.0
    %375 = vmatpush1.msra.mxu0 0.0
    %376 = vmatprep.subr.mxu0 0.0
    %377 = vmatpush1.msra.mxu0 0.0
    %378 = vmatprep.subr.mxu0 0.0
    %379 = vmatpush1.msra.mxu0 0.0
    %380 = vmatprep.subr.mxu0 0.0
    %381 = vmatpush1.msra.mxu0 0.0
    %382 = vmatprep.subr.mxu0 0.0
    %383 = vmatpush1.msra.mxu0 0.0
    %384 = vmatprep.subr.mxu0 0.0
    %385 = vmatpush1.msra.mxu0 0.0
    %386 = vmatprep.subr.mxu0 0.0
    %387 = vmatpush1.msra.mxu0 0.0
    %388 = vmatprep.subr.mxu0 0.0
    %389 = vmatpush1.msra.mxu0 0.0
    %390 = vmatprep.subr.mxu0 0.0
    %391 = vmatpush1.msra.mxu0 0.0
    %392 = vmatprep.subr.mxu0 0.0
    %393 = vmatpush1.msra.mxu0 0.0
    %394 = vmatprep.subr.mxu0 0.0
    %395 = vmatpush1.msra.mxu0 0.0
    %396 = vmatprep.subr.mxu0 0.0
    %397 = vmatpush1.msra.mxu0 0.0
    %398 = vmatprep.subr.mxu0 0.0
    %399 = vmatpush1.msra.mxu0 %v46
    %400 = vmatprep.subr.mxu0 0.0
    %401 = vmatpush1.msra.mxu0 %v45
    %402 = vmatprep.subr.mxu0 0.0
    %403 = vmatpush1.msra.mxu0 %v44
    %404 = vmatprep.subr.mxu0 0.0
    %405 = vmatpush1.msra.mxu0 %v43
    %406 = vmatprep.subr.mxu0 0.0
    %407 = vmatpush2.msra.mxu0 0.0
    %408 = vmatprep.subr.mxu0 0.0
    %409 = vmatpush2.msra.mxu0 0.0
    %410 = vmatprep.subr.mxu0 0.0
    %411 = vmatpush2.msra.mxu0 0.0
    %412 = vmatprep.subr.mxu0 0.0
    %413 = vmatpush2.msra.mxu0 0.0
    %414 = vmatprep.subr.mxu0 0.0
    %415 = vmatpush2.msra.mxu0 0.0
    %416 = vmatprep.subr.mxu0 0.0
    %417 = vmatpush2.msra.mxu0 0.0
    %418 = vmatprep.subr.mxu0 0.0
    %419 = vmatpush2.msra.mxu0 0.0
    %420 = vmatprep.subr.mxu0 0.0
    %421 = vmatpush2.msra.mxu0 0.0
    %422 = vmatprep.subr.mxu0 0.0
    %423 = vmatpush2.msra.mxu0 0.0
    %424 = vmatprep.subr.mxu0 0.0
    %425 = vmatpush2.msra.mxu0 0.0
    %426 = vmatprep.subr.mxu0 0.0
    %427 = vmatpush2.msra.mxu0 0.0
    %428 = vmatprep.subr.mxu0 0.0
    %429 = vmatpush2.msra.mxu0 0.0
    %430 = vmatprep.subr.mxu0 0.0
    %431 = vmatpush2.msra.mxu0 0.0
    %432 = vmatprep.subr.mxu0 0.0
    %433 = vmatpush2.msra.mxu0 0.0
    %434 = vmatprep.subr.mxu0 0.0
    %435 = vmatpush2.msra.mxu0 0.0
    %436 = vmatprep.subr.mxu0 0.0
    %437 = vmatpush2.msra.mxu0 0.0
    %438 = vmatprep.mubr.f32.mxu0 0.0
    %439 = vmatmul.mubr.f32.gmra.mxu0 %v372
    %v440 = vpop.f32.mrf.mxu0
    %v441 = vadd.f32 0.0, %v440
    %v442 = vpop.f32.mrf.mxu0
    %443 = vdwg.mxu0
    %444 = vst.msk [vmem:[#allocation6] sm:$0xff] %vm275, %v441
    // Predicated region
    $region26: #{tpu_custom_call.1} parent=1 // pred_check
      _
    $region27: #{tpu_custom_call.1} parent=1 // pred_check_branch
      %446 = sbr.rel (0) target = $region29
    $region28: #{tpu_custom_call.1} parent=1 // pred_region
      %s448 = ssub.s32 256, 256
      %449 = vsyncadd [#allocation4], %s448
      %s450 = sshll.u32 [#allocation5], 4
      %s451 = int_to_ptr.vmem [resolvable:$true] %s450
      %456 = dma.vmem_to_hbm [thread:$0]  %s451, 256, %s5, [#allocation4], 128, 128, 8
    $region29: #{tpu_custom_call.1} parent=1 // pred_fallthru
      _
    // Predicated region
    $region30: #{tpu_custom_call.1} parent=1 // pred_check
      _
    $region31: #{tpu_custom_call.1} parent=1 // pred_check_branch
      %458 = sbr.rel (0) target = $region33
    $region32: #{tpu_custom_call.1} parent=1 // pred_region
      %s460 = ssub.s32 128, 128
      %461 = vsyncadd [#allocation7], %s460
      %s463 = sshll.u32 [#allocation6], 4
      %s464 = int_to_ptr.vmem [resolvable:$true] %s463
      %466 = dma.vmem_to_hbm [thread:$0]  %s464, 128, %s6, [#allocation7]
    $region33: #{tpu_custom_call.1} parent=1 // pred_fallthru
      _
    // Predicated region
    $region34: #{tpu_custom_call.1} parent=1 // pred_check
      _
    $region35: #{tpu_custom_call.1} parent=1 // pred_check_branch
      %468 = sbr.rel (0) target = $region37
    $region36: #{tpu_custom_call.1} parent=1 // pred_region
      %469 = dma.done [#allocation4], 256
    $region37: #{tpu_custom_call.1} parent=1 // pred_fallthru
      _
    // Predicated region
    $region38: #{tpu_custom_call.1} parent=1 // pred_check
      _
    $region39: #{tpu_custom_call.1} parent=1 // pred_check_branch
      %471 = sbr.rel (0) target = $region41
    $region40: #{tpu_custom_call.1} parent=1 // pred_region
      %472 = dma.done [#allocation7], 128
    $region41: #{tpu_custom_call.1} parent=1 // pred_fallthru
      _
    %473 = vsyncpa [#allocation3], 1
    %474 = vsyncpa [#allocation4], 1
    %475 = vsyncpa [#allocation7], 1

</llo_original>
